<compile_context>
chip_gen: v5e
topology: v5e:2x2
jax: 0.10.0
libtpu: 0.0.40
codegen_flags: <defaults>
</compile_context>

<pallas_src>
import math

import jax
import jax.numpy as jnp
from jax import lax
from jax.experimental import pallas as pl
from jax.experimental.pallas import tpu as pltpu

_LANES = 128
_SUBLANES = 8


def _round_up(x, m):
    return ((x + m - 1) // m) * m


def _make_kernel(tb, rows, has_pw, mask_rows):
    """Build the per-block kernel.

    Each grid step processes one (tb, 128) tile of the lane-dense layout and
    writes a (1, 8, 128) partial sum (pure-VPU staged reduction; the tiny
    cross-lane reduce + focal epilogue run once in plain JAX).
    """

    def kernel(*refs):
        if has_pw:
            x_ref, t_ref, pw_ref, o_ref = refs
        else:
            x_ref, t_ref, o_ref = refs

        x = x_ref[...].astype(jnp.float32)       # (tb, 128) logits
        t = t_ref[...].astype(jnp.float32)       # (tb, 128) targets in [0, 1]

        # Stable softplus(-x) = max(-x,0) + log1p(exp(-|x|));
        # softplus(x) = softplus(-x) + x.
        sp_neg = jnp.maximum(-x, 0.0) + jnp.log1p(jnp.exp(-jnp.abs(x)))
        one_minus_t = 1.0 - t
        if has_pw:
            # pw*t*softplus(-x) + (1-t)*softplus(x)
            #   == sp_neg*(pw*t + 1 - t) + (1-t)*x
            pw = pw_ref[...]                      # (tb, 128) f32, pre-expanded
            elem = sp_neg * (pw * t + one_minus_t) + one_minus_t * x
        else:
            # pos_weight == 1 fast path (the module's default).
            elem = sp_neg + one_minus_t * x

        if mask_rows:
            # Last block may extend past the array; zero the out-of-bounds rows
            # (select, so DMA-pad garbage / NaNs cannot leak through).
            valid = rows - pl.program_id(0) * tb
            row_ids = lax.broadcasted_iota(jnp.int32, (tb, _LANES), 0)
            elem = jnp.where(row_ids < valid, elem, 0.0)

        # Staged reduction: fold tb rows into 8 sublanes with pure VPU adds
        # (reshape groups whole (8,128) native tiles -> layout no-op).
        o_ref[...] = jnp.sum(
            elem.reshape(tb // _SUBLANES, _SUBLANES, _LANES), axis=0
        ).reshape(1, _SUBLANES, _LANES)

    return kernel


def focal_loss(inputs, targets, pos_weight=None, *, alpha=0.5, gamma=1.5,
               tile_rows=1024, min_pallas_elems=4096):
    """Focal loss over logits.

    inputs, targets: (..., C) float (f32 or bf16).  pos_weight: (C,) or None
    (None == all-ones fast path, matching the module default).  Scalar f32.
    """
    C = inputs.shape[-1]
    n_elems = inputs.size
    alpha = jnp.float32(alpha)
    gamma = jnp.float32(gamma)
    has_pw = pos_weight is not None
    if has_pw:
        pw_flat = jnp.asarray(pos_weight, dtype=jnp.float32).reshape(-1)

    def _focal(bce):
        pt = jnp.exp(-bce)
        return alpha * (1.0 - pt) ** gamma * bce

    # ---- Tiny-problem dispatch: pallas_call fixed costs dominate at a few KB.
    if n_elems < min_pallas_elems:
        x = inputs.reshape(-1).astype(jnp.float32)
        t = targets.reshape(-1).astype(jnp.float32)
        sp_neg = jnp.maximum(-x, 0.0) + jnp.log1p(jnp.exp(-jnp.abs(x)))
        one_minus_t = 1.0 - t
        if has_pw:
            pw = jnp.tile(pw_flat, n_elems // C)
            elem = sp_neg * (pw * t + one_minus_t) + one_minus_t * x
        else:
            elem = sp_neg + one_minus_t * x
        return _focal(jnp.sum(elem) / jnp.float32(n_elems))

    # ---- Lane-dense layout: flat (n_elems,) viewed as (rows, 128).
    x_flat = inputs.reshape(-1)
    t_flat = targets.reshape(-1)
    residue = n_elems % _LANES
    if residue:
        # TODO(synk): this pad materializes one extra HBM copy of the inputs;
        # it is only taken when B*C is not a multiple of 128.  Sentinel values
        # give an exactly-zero element loss in f32 (softplus(-200) underflows
        # to 0 and (1 - t) == 0), so no extra masking traffic is needed.
        pad = _LANES - residue
        x_flat = jnp.concatenate(
            [x_flat, jnp.full((pad,), 200.0, dtype=x_flat.dtype)])
        t_flat = jnp.concatenate(
            [t_flat, jnp.ones((pad,), dtype=t_flat.dtype)])
    rows = x_flat.size // _LANES
    # When residue == 0 these reshapes are layout-preserving bitcasts: no copy.
    x2 = x_flat.reshape(rows, _LANES)
    t2 = t_flat.reshape(rows, _LANES)

    # ---- Tile sizing (decoupled from padding; partial last block is masked).
    if has_pw:
        # The flattened pos_weight pattern repeats every C elements, i.e.
        # every pat_rows = C / gcd(C, 128) rows of the (rows, 128) layout.
        pat_rows = C // math.gcd(C, _LANES)
        row_align = (_SUBLANES * pat_rows) // math.gcd(_SUBLANES, pat_rows)
    else:
        row_align = _SUBLANES
    tb = _round_up(min(tile_rows, rows), row_align)
    n_blocks = pl.cdiv(rows, tb)
    mask_rows = (rows % tb) != 0

    in_specs = [pl.BlockSpec((tb, _LANES), lambda b: (b, 0)),
                pl.BlockSpec((tb, _LANES), lambda b: (b, 0))]
    args = [x2, t2]
    if has_pw:
        # Pre-expand the lane pattern once to a full (tb, 128) tile (tb is a
        # multiple of the pattern period, so one tile is valid for every
        # block).  Constant index map -> DMA'd into VMEM once.
        pw_full = jnp.tile(pw_flat, (tb * _LANES) // C).reshape(tb, _LANES)
        in_specs.append(pl.BlockSpec((tb, _LANES), lambda b: (0, 0)))
        args.append(pw_full)

    kernel = _make_kernel(tb, rows, has_pw, mask_rows)

    partials = pl.pallas_call(
        kernel,
        out_shape=jax.ShapeDtypeStruct((n_blocks, _SUBLANES, _LANES),
                                       jnp.float32),
        grid_spec=pltpu.PrefetchScalarGridSpec(
            num_scalar_prefetch=0,
            grid=(n_blocks,),
            in_specs=in_specs,
            out_specs=pl.BlockSpec((1, _SUBLANES, _LANES),
                                   lambda b: (b, 0, 0)),
        ),
        compiler_params=pltpu.CompilerParams(
            dimension_semantics=("parallel",),
            vmem_limit_bytes=32 * 1024 * 1024,
        ),
    )(*args)

    # Tiny epilogue in plain JAX: cross-lane reduce + focal modulation.
    return _focal(jnp.sum(partials) / jnp.float32(n_elems))


if __name__ == "__main__":
    key = jax.random.PRNGKey(0)
    k1, k2, k3 = jax.random.split(key, 3)

    def reference(x, t, pw, alpha=0.5, gamma=1.5):
        x = x.astype(jnp.float32)
        t = t.astype(jnp.float32)
        lp = jnp.log1p(jnp.exp(-jnp.abs(x)))
        sp_neg = jnp.maximum(-x, 0.0) + lp
        sp_pos = jnp.maximum(x, 0.0) + lp
        bce = jnp.mean(pw[None, :] * t * sp_neg + (1.0 - t) * sp_pos)
        pt = jnp.exp(-bce)
        return alpha * (1.0 - pt) ** gamma * bce

    C = 8  # len(TARGET_COLS)

    # Case 1: module defaults (pos_weight all ones) -> fast-path kernel;
    # B*C is a multiple of 128 -> zero-copy lane-dense layout.
    B1 = 1024
    x1 = jax.random.normal(k1, (B1, C), dtype=jnp.float32)            # logits
    t1 = jax.random.bernoulli(k2, 0.3, (B1, C)).astype(jnp.float32)   # labels
    loss1 = jax.block_until_ready(focal_loss(x1, t1, alpha=0.5, gamma=1.5))
    ref1 = reference(x1, t1, jnp.ones((C,), jnp.float32), alpha=0.5, gamma=1.5)
    assert jnp.allclose(loss1, ref1, rtol=1e-5, atol=1e-6), (float(loss1),
                                                             float(ref1))

    # Case 2: explicit pos_weight + B*C not a multiple of 128 (residue path).
    B2 = 1021
    x2 = jax.random.normal(k3, (B2, C), dtype=jnp.float32) * 2.0
    t2 = jax.random.bernoulli(k2, 0.5, (B2, C)).astype(jnp.float32)
    pw = jnp.arange(1, C + 1, dtype=jnp.float32) / 4.0
    loss2 = jax.block_until_ready(focal_loss(x2, t2, pw, alpha=0.25, gamma=2.0))
    ref2 = reference(x2, t2, pw, alpha=0.25, gamma=2.0)
    assert jnp.allclose(loss2, ref2, rtol=1e-5, atol=1e-6), (float(loss2),
                                                             float(ref2))

    print("KERNEL_OK")
</pallas_src>

<mosaic_0001>
module attributes {stable_mosaic.version = 11 : i64} {
  func.func @kernel(%arg0: i32, %arg1: memref<64x128xf32, #tpu.memory_space<vmem>>, %arg2: memref<64x128xf32, #tpu.memory_space<vmem>>, %arg3: memref<1x8x128xf32, #tpu.memory_space<vmem>>) attributes {dimension_semantics = [#tpu.dimension_semantics<parallel>], iteration_bounds = array<i64: 1>, scalar_prefetch = 0 : i64, scratch_operands = 0 : i64, tpu.core_type = #tpu.core_type<tc>, window_params = [{transform_indices = @transform_0, window_bounds = array<i64: 64, 128>}, {transform_indices = @transform_1, window_bounds = array<i64: 64, 128>}, {transform_indices = @transform_2, window_bounds = array<i64: 1, 8, 128>}]} {
    %c0 = arith.constant 0 : index
    %c0_0 = arith.constant 0 : index
    %0 = vector.load %arg1[%c0, %c0_0] : memref<64x128xf32, #tpu.memory_space<vmem>>, vector<64x128xf32>
    %c0_1 = arith.constant 0 : index
    %c0_2 = arith.constant 0 : index
    %1 = vector.load %arg2[%c0_1, %c0_2] : memref<64x128xf32, #tpu.memory_space<vmem>>, vector<64x128xf32>
    %cst = arith.constant 0.000000e+00 : f32
    %2 = vector.broadcast %cst : f32 to vector<64x128xf32>
    %3 = arith.subf %2, %0 : vector<64x128xf32>
    %cst_3 = arith.constant 0.000000e+00 : f32
    %4 = vector.broadcast %cst_3 : f32 to vector<64x128xf32>
    %5 = arith.maximumf %3, %4 : vector<64x128xf32>
    %6 = math.absf %0 : vector<64x128xf32>
    %cst_4 = arith.constant 0.000000e+00 : f32
    %7 = vector.broadcast %cst_4 : f32 to vector<64x128xf32>
    %8 = arith.subf %7, %6 : vector<64x128xf32>
    %9 = math.exp %8 : vector<64x128xf32>
    %10 = math.log1p %9 : vector<64x128xf32>
    %11 = arith.addf %5, %10 : vector<64x128xf32>
    %cst_5 = arith.constant 1.000000e+00 : f32
    %12 = vector.broadcast %cst_5 : f32 to vector<64x128xf32>
    %13 = arith.subf %12, %1 : vector<64x128xf32>
    %14 = arith.mulf %13, %0 : vector<64x128xf32>
    %15 = arith.addf %11, %14 : vector<64x128xf32>
    %16 = vector.shape_cast %15 : vector<64x128xf32> to vector<8x8x128xf32>
    %cst_6 = arith.constant dense<0.000000e+00> : vector<8x128xf32>
    %17 = vector.multi_reduction <add>, %16, %cst_6 [0] : vector<8x8x128xf32> to vector<8x128xf32>
    %18 = vector.shape_cast %17 : vector<8x128xf32> to vector<1x8x128xf32>
    %c0_7 = arith.constant 0 : index
    %c0_8 = arith.constant 0 : index
    %c0_9 = arith.constant 0 : index
    %19 = vector.load %arg3[%c0_7, %c0_8, %c0_9] : memref<1x8x128xf32, #tpu.memory_space<vmem>>, vector<1x8x128xf32>
    tpu.vector_store %arg3[%c0_7, %c0_8, %c0_9], %18 {strides = array<i32>} : memref<1x8x128xf32, #tpu.memory_space<vmem>>, vector<1x8x128xf32>,
    return
  }
  func.func @transform_0(%arg0: i32) -> (i32, i32) {
    %c0_i32 = arith.constant 0 : i32
    %c0_i32_0 = arith.constant 0 : i32
    return %arg0, %c0_i32 : i32, i32
  }
  func.func @transform_1(%arg0: i32) -> (i32, i32) {
    %c0_i32 = arith.constant 0 : i32
    %c0_i32_0 = arith.constant 0 : i32
    return %arg0, %c0_i32 : i32, i32
  }
  func.func @transform_2(%arg0: i32) -> (i32, i32, i32) {
    %c0_i32 = arith.constant 0 : i32
    %c0_i32_0 = arith.constant 0 : i32
    %c0_i32_1 = arith.constant 0 : i32
    return %arg0, %c0_i32, %c0_i32_0 : i32, i32, i32
  }
}

</mosaic_0001>

<llo_original>
// kernel: tpu_custom_call.1
$region0: #{tpu_custom_call.1}
  #allocation0 [shape = 'u32[]', space=smem, size = 0x4, offset = 0x4, fixed_abs, tag = 'smem constant byte address 0x4 - core index']
  #allocation1 [shape = 'u32[72,128]{1,0:T(1,128)}', space=vmem, size = 0x9000, scoped, tag = 'internal scratch']
  %s0 = inlined_call_operand.hbm [shape: f32[64,128], index: 0, kind: input, shape index: {}]
  %s1 = inlined_call_operand.hbm [shape: f32[64,128], index: 1, kind: input, shape index: {}]
  %s2 = inlined_call_operand.hbm [shape: f32[1,8,128], index: 2, kind: output, shape index: {}]
  %s3 = sld [smem:[#allocation0]]
  $region26: #{tpu_custom_call.1} parent=0
    _
  %s5 = ssub.s32 1, %s3
  %s6 = scalar_select 0, %s5, %s3
  $region1: #{tpu_custom_call.1} parent=0
    #allocation2 [shape = 'u8[32768]{0}', space=vmem, size = 0x8000, scoped, tag = 'input window, operand 0, single buffered']
    #allocation3 [shape = 's32[1]{0}', space=sflag, size = 0x4, scoped, tag = 'scoped memory for tpu_custom_call.1']
    #allocation4 [shape = 's32[1]{0}', space=sflag, size = 0x4, scoped, tag = 'scoped memory for tpu_custom_call.1']
    #allocation5 [shape = 'u8[32768]{0}', space=vmem, size = 0x8000, scoped, tag = 'input window, operand 1, single buffered']
    #allocation6 [shape = 's32[1]{0}', space=sflag, size = 0x4, scoped, tag = 'scoped memory for tpu_custom_call.1']
    #allocation7 [shape = 'u8[4096]{0}', space=vmem, size = 0x1000, scoped, tag = 'output window, operand 0, single buffered']
    %7 = vsyncpa [#allocation3], 0
    %8 = vsyncpa [#allocation6], 0
    %9 = vsyncpa [#allocation4], 0
    // Predicated region
    $region2: #{tpu_custom_call.1} parent=1 // pred_check
      _
    $region3: #{tpu_custom_call.1} parent=1 // pred_check_branch
      %11 = sbr.rel (0) target = $region5
    $region4: #{tpu_custom_call.1} parent=1 // pred_region
      %13 = vsyncadd [#allocation3], 0
      %s14 = sshll.u32 %s0, 4
      %s15 = int_to_ptr.hbm [resolvable:$true] %s14
      %s16 = sshll.u32 [#allocation2], 4
      %s17 = int_to_ptr.vmem [resolvable:$true] %s16
      %22 = dma.hbm_to_vmem [thread:$0]  %s15, 1024, %s17, [#allocation3], 128, 128, 8
    $region5: #{tpu_custom_call.1} parent=1 // pred_fallthru
      _
    // Predicated region
    $region6: #{tpu_custom_call.1} parent=1 // pred_check
      _
    $region7: #{tpu_custom_call.1} parent=1 // pred_check_branch
      %24 = sbr.rel (0) target = $region9
    $region8: #{tpu_custom_call.1} parent=1 // pred_region
      %26 = vsyncadd [#allocation6], 0
      %s27 = sshll.u32 %s1, 4
      %s28 = int_to_ptr.hbm [resolvable:$true] %s27
      %s29 = sshll.u32 [#allocation5], 4
      %s30 = int_to_ptr.vmem [resolvable:$true] %s29
      %35 = dma.hbm_to_vmem [thread:$0]  %s28, 1024, %s30, [#allocation6], 128, 128, 8
    $region9: #{tpu_custom_call.1} parent=1 // pred_fallthru
      _
    // Predicated region
    $region10: #{tpu_custom_call.1} parent=1 // pred_check
      _
    $region11: #{tpu_custom_call.1} parent=1 // pred_check_branch
      %37 = sbr.rel (0) target = $region13
    $region12: #{tpu_custom_call.1} parent=1 // pred_region
      %39 = dma.done [#allocation3], 1024
    $region13: #{tpu_custom_call.1} parent=1 // pred_fallthru
      _
    // Predicated region
    $region14: #{tpu_custom_call.1} parent=1 // pred_check
      _
    $region15: #{tpu_custom_call.1} parent=1 // pred_check_branch
      %41 = sbr.rel (0) target = $region17
    $region16: #{tpu_custom_call.1} parent=1 // pred_region
      %43 = dma.done [#allocation6], 1024
    $region17: #{tpu_custom_call.1} parent=1 // pred_fallthru
      _
    %v44 = vld [vmem:[#allocation2] sm:$0xff]
    %v45 = vld [vmem:[#allocation2 + $0x8] sm:$0xff]
    %v46 = vld [vmem:[#allocation2 + $0x10] sm:$0xff]
    %v47 = vld [vmem:[#allocation2 + $0x18] sm:$0xff]
    %v48 = vld [vmem:[#allocation2 + $0x20] sm:$0xff]
    %v49 = vld [vmem:[#allocation2 + $0x28] sm:$0xff]
    %v50 = vld [vmem:[#allocation2 + $0x30] sm:$0xff]
    %v51 = vld [vmem:[#allocation2 + $0x38] sm:$0xff]
    %v52 = vld [vmem:[#allocation5] sm:$0xff]
    %v53 = vld [vmem:[#allocation5 + $0x8] sm:$0xff]
    %v54 = vld [vmem:[#allocation5 + $0x10] sm:$0xff]
    %v55 = vld [vmem:[#allocation5 + $0x18] sm:$0xff]
    %v56 = vld [vmem:[#allocation5 + $0x20] sm:$0xff]
    %v57 = vld [vmem:[#allocation5 + $0x28] sm:$0xff]
    %v58 = vld [vmem:[#allocation5 + $0x30] sm:$0xff]
    %v59 = vld [vmem:[#allocation5 + $0x38] sm:$0xff]
    %v60 = vsub.f32 0.0, %v44
    %v61 = vsub.f32 0.0, %v45
    %v62 = vsub.f32 0.0, %v46
    %v63 = vsub.f32 0.0, %v47
    %v64 = vsub.f32 0.0, %v48
    %v65 = vsub.f32 0.0, %v49
    %v66 = vsub.f32 0.0, %v50
    %v67 = vsub.f32 0.0, %v51
    %v68 = vmax.f32 %v60, 0.0
    %v69 = vmax.f32 %v61, 0.0
    %v70 = vmax.f32 %v62, 0.0
    %v71 = vmax.f32 %v63, 0.0
    %v72 = vmax.f32 %v64, 0.0
    %v73 = vmax.f32 %v65, 0.0
    %v74 = vmax.f32 %v66, 0.0
    %v75 = vmax.f32 %v67, 0.0
    %v76 = vand.u32 2147483647, %v44
    %v77 = vand.u32 2147483647, %v45
    %v78 = vand.u32 2147483647, %v46
    %v79 = vand.u32 2147483647, %v47
    %v80 = vand.u32 2147483647, %v48
    %v81 = vand.u32 2147483647, %v49
    %v82 = vand.u32 2147483647, %v50
    %v83 = vand.u32 2147483647, %v51
    %v84 = vsub.f32 0.0, %v76
    %v85 = vsub.f32 0.0, %v77
    %v86 = vsub.f32 0.0, %v78
    %v87 = vsub.f32 0.0, %v79
    %v88 = vsub.f32 0.0, %v80
    %v89 = vsub.f32 0.0, %v81
    %v90 = vsub.f32 0.0, %v82
    %v91 = vsub.f32 0.0, %v83
    %v92 = vmul.f32 %v84, 1.442695
    %v93 = vpow.pop %v92
    %v94 = vmul.f32 %v85, 1.442695
    %v95 = vpow.pop %v94
    %v96 = vmul.f32 %v86, 1.442695
    %v97 = vpow.pop %v96
    %v98 = vmul.f32 %v87, 1.442695
    %v99 = vpow.pop %v98
    %v100 = vmul.f32 %v88, 1.442695
    %v101 = vpow.pop %v100
    %v102 = vmul.f32 %v89, 1.442695
    %v103 = vpow.pop %v102
    %v104 = vmul.f32 %v90, 1.442695
    %v105 = vpow.pop %v104
    %v106 = vmul.f32 %v91, 1.442695
    %v107 = vpow.pop %v106
    %v108 = vadd.f32 %v93, 1.0
    %v109 = vlog2.pop %v108
    %v110 = vmul.f32 %v109, 0.6931472
    %v111 = vmul.f32 -0.5, %v93
    %v112 = vadd.f32 %v111, 1.0
    %v113 = vmul.f32 %v112, %v93
    %v114 = vand.u32 2147483647, %v93
    %vm115 = vcmp.lt.f32.partialorder %v114, 0.0004427343
    %v116 = vsel %vm115, %v113, %v110
    %v117 = vadd.f32 %v95, 1.0
    %v118 = vlog2.pop %v117
    %v119 = vmul.f32 %v118, 0.6931472
    %v120 = vmul.f32 -0.5, %v95
    %v121 = vadd.f32 %v120, 1.0
    %v122 = vmul.f32 %v121, %v95
    %v123 = vand.u32 2147483647, %v95
    %vm124 = vcmp.lt.f32.partialorder %v123, 0.0004427343
    %v125 = vsel %vm124, %v122, %v119
    %v126 = vadd.f32 %v97, 1.0
    %v127 = vlog2.pop %v126
    %v128 = vmul.f32 %v127, 0.6931472
    %v129 = vmul.f32 -0.5, %v97
    %v130 = vadd.f32 %v129, 1.0
    %v131 = vmul.f32 %v130, %v97
    %v132 = vand.u32 2147483647, %v97
    %vm133 = vcmp.lt.f32.partialorder %v132, 0.0004427343
    %v134 = vsel %vm133, %v131, %v128
    %v135 = vadd.f32 %v99, 1.0
    %v136 = vlog2.pop %v135
    %v137 = vmul.f32 %v136, 0.6931472
    %v138 = vmul.f32 -0.5, %v99
    %v139 = vadd.f32 %v138, 1.0
    %v140 = vmul.f32 %v139, %v99
    %v141 = vand.u32 2147483647, %v99
    %vm142 = vcmp.lt.f32.partialorder %v141, 0.0004427343
    %v143 = vsel %vm142, %v140, %v137
    %v144 = vadd.f32 %v101, 1.0
    %v145 = vlog2.pop %v144
    %v146 = vmul.f32 %v145, 0.6931472
    %v147 = vmul.f32 -0.5, %v101
    %v148 = vadd.f32 %v147, 1.0
    %v149 = vmul.f32 %v148, %v101
    %v150 = vand.u32 2147483647, %v101
    %vm151 = vcmp.lt.f32.partialorder %v150, 0.0004427343
    %v152 = vsel %vm151, %v149, %v146
    %v153 = vadd.f32 %v103, 1.0
    %v154 = vlog2.pop %v153
    %v155 = vmul.f32 %v154, 0.6931472
    %v156 = vmul.f32 -0.5, %v103
    %v157 = vadd.f32 %v156, 1.0
    %v158 = vmul.f32 %v157, %v103
    %v159 = vand.u32 2147483647, %v103
    %vm160 = vcmp.lt.f32.partialorder %v159, 0.0004427343
    %v161 = vsel %vm160, %v158, %v155
    %v162 = vadd.f32 %v105, 1.0
    %v163 = vlog2.pop %v162
    %v164 = vmul.f32 %v163, 0.6931472
    %v165 = vmul.f32 -0.5, %v105
    %v166 = vadd.f32 %v165, 1.0
    %v167 = vmul.f32 %v166, %v105
    %v168 = vand.u32 2147483647, %v105
    %vm169 = vcmp.lt.f32.partialorder %v168, 0.0004427343
    %v170 = vsel %vm169, %v167, %v164
    %v171 = vadd.f32 %v107, 1.0
    %v172 = vlog2.pop %v171
    %v173 = vmul.f32 %v172, 0.6931472
    %v174 = vmul.f32 -0.5, %v107
    %v175 = vadd.f32 %v174, 1.0
    %v176 = vmul.f32 %v175, %v107
    %v177 = vand.u32 2147483647, %v107
    %vm178 = vcmp.lt.f32.partialorder %v177, 0.0004427343
    %v179 = vsel %vm178, %v176, %v173
    %v180 = vadd.f32 %v68, %v116
    %v181 = vadd.f32 %v69, %v125
    %v182 = vadd.f32 %v70, %v134
    %v183 = vadd.f32 %v71, %v143
    %v184 = vadd.f32 %v72, %v152
    %v185 = vadd.f32 %v73, %v161
    %v186 = vadd.f32 %v74, %v170
    %v187 = vadd.f32 %v75, %v179
    %v188 = vsub.f32 1.0, %v52
    %v189 = vsub.f32 1.0, %v53
    %v190 = vsub.f32 1.0, %v54
    %v191 = vsub.f32 1.0, %v55
    %v192 = vsub.f32 1.0, %v56
    %v193 = vsub.f32 1.0, %v57
    %v194 = vsub.f32 1.0, %v58
    %v195 = vsub.f32 1.0, %v59
    %v196 = vmul.f32 %v188, %v44
    %v197 = vmul.f32 %v189, %v45
    %v198 = vmul.f32 %v190, %v46
    %v199 = vmul.f32 %v191, %v47
    %v200 = vmul.f32 %v192, %v48
    %v201 = vmul.f32 %v193, %v49
    %v202 = vmul.f32 %v194, %v50
    %v203 = vmul.f32 %v195, %v51
    %v204 = vadd.f32 %v180, %v196
    %v205 = vadd.f32 %v181, %v197
    %v206 = vadd.f32 %v182, %v198
    %v207 = vadd.f32 %v183, %v199
    %v208 = vadd.f32 %v184, %v200
    %v209 = vadd.f32 %v185, %v201
    %v210 = vadd.f32 %v186, %v202
    %v211 = vadd.f32 %v187, %v203
    %v212 = vadd.f32 %v204, %v205
    %v213 = vadd.f32 %v212, %v206
    %v214 = vadd.f32 %v213, %v207
    %v215 = vadd.f32 %v214, %v208
    %v216 = vadd.f32 %v215, %v209
    %v217 = vadd.f32 %v216, %v210
    %v218 = vadd.f32 %v217, %v211
    %219 = vst [vmem:[#allocation7] sm:$0xff] %v218
    // Predicated region
    $region18: #{tpu_custom_call.1} parent=1 // pred_check
      _
    $region19: #{tpu_custom_call.1} parent=1 // pred_check_branch
      %221 = sbr.rel (0) target = $region21
    $region20: #{tpu_custom_call.1} parent=1 // pred_region
      %223 = vsyncadd [#allocation4], 0
      %s225 = sshll.u32 [#allocation7], 4
      %s226 = int_to_ptr.vmem [resolvable:$true] %s225
      %s227 = sshll.u32 %s2, 4
      %s228 = int_to_ptr.hbm [resolvable:$true] %s227
      %230 = dma.vmem_to_hbm [thread:$0]  %s226, 128, %s228, [#allocation4]
    $region21: #{tpu_custom_call.1} parent=1 // pred_fallthru
      _
    // Predicated region
    $region22: #{tpu_custom_call.1} parent=1 // pred_check
      _
    $region23: #{tpu_custom_call.1} parent=1 // pred_check_branch
      %232 = sbr.rel (0) target = $region25
    $region24: #{tpu_custom_call.1} parent=1 // pred_region
      %234 = dma.done [#allocation4], 128
    $region25: #{tpu_custom_call.1} parent=1 // pred_fallthru
      _
    %235 = vsyncpa [#allocation3], 1
    %236 = vsyncpa [#allocation6], 1
    %237 = vsyncpa [#allocation4], 1

</llo_original>
